<compile_context>
chip_gen: v7x
topology: tpu7x:2x2x1
jax: 0.10.0
libtpu: 0.0.40
codegen_flags: <defaults>
</compile_context>

<pallas_src>
import functools

import jax
import jax.numpy as jnp
from jax.experimental import pallas as pl
from jax.experimental.pallas import tpu as pltpu


def _softmax_pool_kernel(attn_ref, mask_ref, out_ref):
    """Enhanced softmax + (head, query) pooling for one (head_block, q_block) tile.

    attn_ref : (Hblk, Tq, S) producer dtype (f32 or bf16) — last-layer attention
    mask_ref : (1, S)        f32 — enhance mask (broadcast over query rows & heads)
    out_ref  : (1, S)        f32 — running sum over heads & queries of softmax rows
    """
    h = pl.program_id(2)

    @pl.when(h == 0)
    def _init():
        out_ref[...] = jnp.zeros_like(out_ref)

    attn = attn_ref[...]
    hblk, tq, s = attn.shape
    a2 = attn.reshape(hblk * tq, s)                  # heads stacked along sublanes
    mask = mask_ref[...].astype(a2.dtype)            # (1, S)

    # Elementwise math in the producer dtype (bf16 on v6e/v7x if upstream is bf16).
    # attn is a post-softmax probability in [0, 1] and the mask is <= 1.5, so the
    # scores lie in [0, 1.5] and exp() needs no row-max stabilization (saves an XLU
    # lane reduce plus one VALU subtract per element).  Do NOT feed raw logits here.
    e = jnp.exp(a2 * mask)                           # (R, S), EUP

    denom = jnp.sum(e.astype(jnp.float32), axis=-1, keepdims=True)   # (R, 1) f32
    inv = pl.reciprocal(denom, approx=True)                          # (R, 1), EUP

    # Column-sum of the normalized probabilities on the otherwise-idle MXU:
    #   row[k] = sum_r inv[r] * e[r, k]   (contract over the head*query axis)
    row = jax.lax.dot_general(
        inv.astype(e.dtype), e,
        dimension_numbers=(((0,), (0,)), ((), ())),
        preferred_element_type=jnp.float32)                          # (1, S)
    out_ref[...] += row


def _finalize_kernel(partial_ref, hidden_ref, w_ref, b_ref, out_ref, *, scale):
    """Combine query tiles, pool against hidden states, linear + relu (per batch).

    partial_ref : (n_q, 1, S) f32   summed softmax rows per query tile
    hidden_ref  : (S, D)      producer dtype — last hidden states
    w_ref       : (D, Cp)     f32   linear weight (x @ W layout), lane-padded
    b_ref       : (1, Cp)     f32   linear bias, lane-padded (pads are zero)
    out_ref     : (1, Cp)     f32   relu(logits), lane-padded
    """
    total = jnp.sum(partial_ref[...], axis=0)         # (1, S)
    avg = total * scale                               # mean over heads & queries
    hidden = hidden_ref[...]                          # (S, D), native dtype
    pooled = jnp.dot(avg.astype(hidden.dtype), hidden,
                     preferred_element_type=jnp.float32)               # (1, D)
    logits = jnp.dot(pooled, w_ref[...],
                     preferred_element_type=jnp.float32) + b_ref[...]  # (1, Cp)
    # dropout = identity (eval) -> linear -> relu
    out_ref[...] = jnp.maximum(logits, 0.0)


def renyi_head(last_attention, enhance_mask, hidden_states, weight_t, bias,
               *, head_block=None, q_block=None):
    """last_attention (B,H,S,S), enhance_mask (B,1,S), hidden_states (B,S,D),
    weight_t (D,C) for x @ W, bias (C,) -> relu logits (B,C) f32.

    head_block : heads per grid step (amortizes per-step pipeline overhead).
    q_block    : query rows per grid step; the query axis is a *parallel* grid axis,
                 so q_block < S keeps both v7x TensorCores busy at B == 1 and shrinks
                 live (R,S) f32 temporaries on v5e.
    """
    B, H, S, _ = last_attention.shape
    D = hidden_states.shape[-1]
    C = weight_t.shape[-1]
    c_pad = ((C + 127) // 128) * 128               # lane-dense logits; sliced below

    if head_block is None:
        head_block = next(hb for hb in (4, 3, 2, 1) if H % hb == 0)
    if q_block is None:
        q_block = S if B >= 2 else max(8, S // 2)
    assert H % head_block == 0
    assert S % q_block == 0 and q_block % 8 == 0
    n_q = S // q_block

    # Heavy tensors keep their producer dtype (no extra wrapper-cast HBM pass).
    mask = enhance_mask.reshape(B, 1, S).astype(jnp.float32)
    w = jnp.zeros((D, c_pad), jnp.float32).at[:, :C].set(weight_t.astype(jnp.float32))
    b = jnp.zeros((1, c_pad), jnp.float32).at[:, :C].set(
        jnp.reshape(bias, (1, C)).astype(jnp.float32))

    # Pass 1: enhanced softmax + (head, query) pooling of probability rows.
    # VMEM/step: 2 * head_block*q_block*S*itemsize (double-buffered attn) plus the
    # (R,S) exp temp — with the defaults this stays well under the 32 MiB scoped
    # budget on every generation, including v7x (64 MiB physical VMEM).
    partial = pl.pallas_call(
        _softmax_pool_kernel,
        out_shape=jax.ShapeDtypeStruct((B, n_q, 1, S), jnp.float32),
        grid_spec=pltpu.PrefetchScalarGridSpec(
            num_scalar_prefetch=0,
            grid=(B, n_q, H // head_block),
            in_specs=[
                pl.BlockSpec((None, head_block, q_block, S),
                             lambda b_, q_, h_: (b_, h_, q_, 0)),
                pl.BlockSpec((None, 1, S), lambda b_, q_, h_: (b_, 0, 0)),
            ],
            out_specs=pl.BlockSpec((None, None, 1, S),
                                   lambda b_, q_, h_: (b_, q_, 0, 0)),
        ),
        compiler_params=pltpu.CompilerParams(
            dimension_semantics=("parallel", "parallel", "arbitrary")),
    )(last_attention, mask)

    # Pass 2 (tiny): combine query tiles, pool against hidden, linear, relu.
    out = pl.pallas_call(
        functools.partial(_finalize_kernel, scale=1.0 / float(H * S)),
        out_shape=jax.ShapeDtypeStruct((B, 1, c_pad), jnp.float32),
        grid_spec=pltpu.PrefetchScalarGridSpec(
            num_scalar_prefetch=0,
            grid=(B,),
            in_specs=[
                pl.BlockSpec((None, n_q, 1, S), lambda b_: (b_, 0, 0, 0)),
                pl.BlockSpec((None, S, D), lambda b_: (b_, 0, 0)),
                pl.BlockSpec((D, c_pad), lambda b_: (0, 0)),
                pl.BlockSpec((1, c_pad), lambda b_: (0, 0)),
            ],
            out_specs=pl.BlockSpec((None, 1, c_pad), lambda b_: (b_, 0, 0)),
        ),
        compiler_params=pltpu.CompilerParams(
            dimension_semantics=("parallel",)),
    )(partial, hidden_states, w, b)
    return out[:, 0, :C]


def reference_head(last_attention, enhance_mask, hidden_states, weight_t, bias):
    """Pure-JAX reference mirroring the PyTorch forward (eval mode)."""
    B, H, S, _ = last_attention.shape
    em = enhance_mask.reshape(B, 1, 1, S)                         # (B,1,1,S)
    enhanced = last_attention * em                                # (B,H,S,S)
    probs = jax.nn.softmax(enhanced, axis=-1)
    context = jnp.einsum('bhqk,bkd->bhqd', probs, hidden_states)  # (B,H,S,D)
    pooled = context.mean(axis=2).mean(axis=1)                    # (B,D)
    logits = pooled @ weight_t + bias                             # (B,C)
    return jnp.maximum(logits, 0.0)


if __name__ == "__main__":
    # Small but lane-aligned stand-ins (production: H=12, S=512, D=768, C=9).
    B, H, S, D, C = 2, 4, 128, 128, 9

    key = jax.random.PRNGKey(0)
    k1, k2, k3, k4, k5 = jax.random.split(key, 5)

    # Synthetic "BERT outputs" (deterministic); kept in f32, the encoder's dtype.
    last_attention = jax.nn.softmax(
        jax.random.normal(k1, (B, H, S, S), dtype=jnp.float32), axis=-1)
    hidden_states = jax.random.normal(k2, (B, S, D), dtype=jnp.float32)

    # Synthetic enhance mask: entries in {1.0, 1.5} (enhance_factor = 1.5).
    enhance_sel = jax.random.bernoulli(k3, p=0.3, shape=(B, 1, S))
    enhance_mask = jnp.where(enhance_sel, 1.5, 1.0).astype(jnp.float32)

    # Deterministic Linear(D -> 9) stand-in parameters (torch layout (out, in)).
    weight = jax.random.normal(k4, (C, D), dtype=jnp.float32) * 0.1
    bias = jax.random.normal(k5, (C,), dtype=jnp.float32) * 0.1
    weight_t = weight.T                      # (D, C) for x @ W

    ref = reference_head(last_attention, enhance_mask, hidden_states, weight_t, bias)

    # Default configuration: whole-S query tiles, 4 heads per grid step.
    out = renyi_head(last_attention, enhance_mask, hidden_states, weight_t, bias)
    out = jax.block_until_ready(out)
    assert out.shape == (B, C)
    assert jnp.allclose(out, ref, atol=1e-2, rtol=1e-2), (out, ref)

    # Small-batch / v7x configuration: query tiling (parallel axis) + smaller head block.
    out2 = renyi_head(last_attention, enhance_mask, hidden_states, weight_t, bias,
                      head_block=2, q_block=64)
    out2 = jax.block_until_ready(out2)
    assert jnp.allclose(out2, ref, atol=1e-2, rtol=1e-2), (out2, ref)

    print("KERNEL_OK")
</pallas_src>

<mosaic_0001>
module attributes {stable_mosaic.version = 11 : i64} {
  func.func @_softmax_pool_kernel(%arg0: i32, %arg1: i32, %arg2: i32, %arg3: memref<1x4x128x128xf32, #tpu.memory_space<vmem>>, %arg4: memref<1x1x128xf32, #tpu.memory_space<vmem>>, %arg5: memref<1x1x1x128xf32, #tpu.memory_space<vmem>>) attributes {dimension_semantics = [#tpu.dimension_semantics<parallel>, #tpu.dimension_semantics<parallel>, #tpu.dimension_semantics<arbitrary>], iteration_bounds = array<i64: 2, 1, 1>, scalar_prefetch = 0 : i64, scratch_operands = 0 : i64, tpu.core_type = #tpu.core_type<tc>, window_params = [{transform_indices = @transform_0, window_bounds = array<i64: 1, 4, 128, 128>}, {transform_indices = @transform_1, window_bounds = array<i64: 1, 1, 128>}, {transform_indices = @transform_2, window_bounds = array<i64: 1, 1, 1, 128>}]} {
    %c0_i32 = arith.constant 0 : i32
    %0 = arith.cmpi eq, %arg2, %c0_i32 : i32
    %1 = arith.extui %0 : i1 to i32
    %c0_i32_0 = arith.constant 0 : i32
    %2 = arith.cmpi ne, %1, %c0_i32_0 : i32
    scf.if %2 {
      %cst_16 = arith.constant 0.000000e+00 : f32
      %21 = vector.broadcast %cst_16 : f32 to vector<1x128xf32>
      %c0_17 = arith.constant 0 : index
      %c0_18 = arith.constant 0 : index
      %c0_19 = arith.constant 0 : index
      %c0_20 = arith.constant 0 : index
      %22 = vector.load %arg5[%c0_17, %c0_18, %c0_19, %c0_20] : memref<1x1x1x128xf32, #tpu.memory_space<vmem>>, vector<1x1x1x128xf32>
      %23 = vector.shape_cast %22 : vector<1x1x1x128xf32> to vector<1x128xf32>
      %24 = vector.shape_cast %21 : vector<1x128xf32> to vector<1x1x1x128xf32>
      tpu.vector_store %arg5[%c0_17, %c0_18, %c0_19, %c0_20], %24 {strides = array<i32>} : memref<1x1x1x128xf32, #tpu.memory_space<vmem>>, vector<1x1x1x128xf32>,
    } else {
    }
    %c0 = arith.constant 0 : index
    %c0_1 = arith.constant 0 : index
    %c0_2 = arith.constant 0 : index
    %c0_3 = arith.constant 0 : index
    %3 = vector.load %arg3[%c0, %c0_1, %c0_2, %c0_3] : memref<1x4x128x128xf32, #tpu.memory_space<vmem>>, vector<1x4x128x128xf32>
    %4 = vector.shape_cast %3 : vector<1x4x128x128xf32> to vector<4x128x128xf32>
    %5 = vector.shape_cast %4 : vector<4x128x128xf32> to vector<512x128xf32>
    %c0_4 = arith.constant 0 : index
    %c0_5 = arith.constant 0 : index
    %c0_6 = arith.constant 0 : index
    %6 = vector.load %arg4[%c0_4, %c0_5, %c0_6] : memref<1x1x128xf32, #tpu.memory_space<vmem>>, vector<1x1x128xf32>
    %7 = vector.shape_cast %6 : vector<1x1x128xf32> to vector<1x128xf32>
    %8 = vector.broadcast %7 : vector<1x128xf32> to vector<512x128xf32>
    %9 = arith.mulf %5, %8 : vector<512x128xf32>
    %10 = math.exp %9 : vector<512x128xf32>
    %cst = arith.constant dense<0.000000e+00> : vector<512xf32>
    %11 = vector.multi_reduction <add>, %10, %cst [1] : vector<512x128xf32> to vector<512xf32>
    %12 = vector.shape_cast %11 : vector<512xf32> to vector<512x1xf32>
    %13 = tpu.reciprocal %12 {approx = true} : vector<512x1xf32> -> vector<512x1xf32>
    %cst_7 = arith.constant dense<0.000000e+00> : vector<1x128xf32>
    %14 = tpu.matmul %13, %10, %cst_7 {dimension_numbers = #tpu.dot_dimension_numbers<[0], [0], [1], [1], [0, 1, 1, 1], [], []>} : vector<512x1xf32>, vector<512x128xf32>, vector<1x128xf32> -> vector<1x128xf32>
    %c0_8 = arith.constant 0 : index
    %c0_9 = arith.constant 0 : index
    %c0_10 = arith.constant 0 : index
    %c0_11 = arith.constant 0 : index
    %15 = vector.load %arg5[%c0_8, %c0_9, %c0_10, %c0_11] : memref<1x1x1x128xf32, #tpu.memory_space<vmem>>, vector<1x1x1x128xf32>
    %16 = vector.shape_cast %15 : vector<1x1x1x128xf32> to vector<1x128xf32>
    %17 = arith.addf %16, %14 : vector<1x128xf32>
    %c0_12 = arith.constant 0 : index
    %c0_13 = arith.constant 0 : index
    %c0_14 = arith.constant 0 : index
    %c0_15 = arith.constant 0 : index
    %18 = vector.load %arg5[%c0_12, %c0_13, %c0_14, %c0_15] : memref<1x1x1x128xf32, #tpu.memory_space<vmem>>, vector<1x1x1x128xf32>
    %19 = vector.shape_cast %18 : vector<1x1x1x128xf32> to vector<1x128xf32>
    %20 = vector.shape_cast %17 : vector<1x128xf32> to vector<1x1x1x128xf32>
    tpu.vector_store %arg5[%c0_12, %c0_13, %c0_14, %c0_15], %20 {strides = array<i32>} : memref<1x1x1x128xf32, #tpu.memory_space<vmem>>, vector<1x1x1x128xf32>,
    return
  }
  func.func @transform_0(%arg0: i32, %arg1: i32, %arg2: i32) -> (i32, i32, i32, i32) {
    %c0_i32 = arith.constant 0 : i32
    %c0_i32_0 = arith.constant 0 : i32
    return %arg0, %arg2, %arg1, %c0_i32 : i32, i32, i32, i32
  }
  func.func @transform_1(%arg0: i32, %arg1: i32, %arg2: i32) -> (i32, i32, i32) {
    %c0_i32 = arith.constant 0 : i32
    %c0_i32_0 = arith.constant 0 : i32
    %c0_i32_1 = arith.constant 0 : i32
    return %arg0, %c0_i32, %c0_i32_0 : i32, i32, i32
  }
  func.func @transform_2(%arg0: i32, %arg1: i32, %arg2: i32) -> (i32, i32, i32, i32) {
    %c0_i32 = arith.constant 0 : i32
    %c0_i32_0 = arith.constant 0 : i32
    %c0_i32_1 = arith.constant 0 : i32
    return %arg0, %arg1, %c0_i32, %c0_i32_0 : i32, i32, i32, i32
  }
}

</mosaic_0001>

<llo_original>
// kernel: tpu_custom_call.1
$region0: #{tpu_custom_call.1}
  #allocation0 [shape = 'u32[]', space=smem, size = 0x4, offset = 0x4, fixed_abs, tag = 'smem constant byte address 0x4 - core index']
  #allocation1 [shape = 'u32[144,128]{1,0:T(1,128)}', space=vmem, size = 0x12000, scoped, tag = 'internal scratch']
  %s0 = inlined_call_operand.hbm [shape: f32[2,4,128,128], index: 0, kind: input, shape index: {}]
  %s1 = inlined_call_operand.vmem [shape: f32[2,1,128], index: 1, kind: input, shape index: {}]
  %s2 = inlined_call_operand.hbm [shape: f32[2,1,1,128], index: 2, kind: output, shape index: {}]
  %s3 = sld [smem:[#allocation0]]
  $region49: #{tpu_custom_call.1} parent=0
    _
  %s5 = ssub.s32 1, %s3
  %s6 = scalar_select 0, %s5, %s3
  $region1: #{tpu_custom_call.1} parent=0
    #allocation2 [shape = 'u8[524288]{0}', space=vmem, size = 0x80000, scoped, tag = 'input window, operand 0']
    #allocation3 [shape = 's32[2]{0}', space=sflag, size = 0x8, scoped, tag = 'scoped memory for tpu_custom_call.1']
    #allocation4 [shape = 's32[2]{0}', space=sflag, size = 0x8, scoped, tag = 'scoped memory for tpu_custom_call.1']
    #allocation5 [shape = 'u8[1024]{0}', space=vmem, size = 0x400, scoped, tag = 'output window, operand 0']
    %7 = vsyncpa [#allocation3], 0
    %s8 = scalar_lea.sflag [#allocation3], 1
    %9 = vsyncpa %s8, 0
    %10 = vsyncpa [#allocation4], 0
    %s11 = scalar_lea.sflag [#allocation4], 1
    %12 = vsyncpa %s11, 0
    loop: start=0, step=1, limit=4
    $region2: #{tpu_custom_call.1} parent=1 // loop_pre_header
      _
    $region3: #{tpu_custom_call.1} parent=1 // loop_header
      %s14 = sphi 0, %s18
      %p15 = scmp.ge.s32.totalorder %s14, 4
      %s21 = sphi 0, %s40
      %s22 = sphi 0, %s36
      %s23 = sphi 0, %s32
      %s24 = sphi 0, %s21
      %s25 = sphi 0, %s22
      %s26 = sphi 0, %s23
      %s27 = sphi 0, %s24
      %s28 = sphi 0, %s25
      %s29 = sphi 0, %s26
      %s47 = sphi 0, %s49
      %s50 = sphi 0, %s47
      %s51 = sphi 0, %s50
      %s67 = sphi 0, %s51
      %s73 = sphi 0, %s75
      %s76 = sphi 0, %s73
      %s77 = sphi 0, %s76
      %s93 = sphi 0, %s77
      %s101 = sphi 0, %s103
      %s104 = sphi 0, %s101
      %s105 = sphi 0, %s104
      %s121 = sphi 0, %s105
    $region4: #{tpu_custom_call.1} parent=1 // loop_header_branch
      %17 = sbr.rel (%p15) target = $region8
    $region5: #{tpu_custom_call.1} parent=1 // loop_body
      %s19 = ssub.s32 %s14, 1
      %s20 = ssub.s32 %s14, 2
      %s30 = sadd.s32 1, %s23
      %p31 = scmp.ge.s32.totalorder %s30, 1
      %s32 = scalar_select %p31, 0, %s30
      %s33 = sadd.s32 1, %s22
      %s34 = scalar_select %p31, %s33, %s22
      %p35 = scmp.ge.s32.totalorder %s34, 1
      %s36 = scalar_select %p35, 0, %s34
      %s37 = sadd.s32 1, %s21
      %s38 = scalar_select %p35, %s37, %s21
      %p39 = scmp.ge.s32.totalorder %s38, 2
      %s40 = scalar_select %p39, 0, %s38
      %s41 = ssub.s32 %s21, %s40
      %s42 = ssub.s32 %s23, %s32
      %s43 = sor.u32 %s41, %s42
      %s44 = ssub.s32 %s22, %s36
      %s45 = sor.u32 %s43, %s44
      %p46 = scmp.eq.s32.totalorder %s45, 0
      %s48 = sadd.s32 %s47, 1
      %s49 = scalar_select %p46, %s47, %s48
      %p52 = pneg %p46
      %p53 = scmp.eq.s32.totalorder %s14, 1
      %p54 = por %p52, %p53
      %p55 = scmp.ne.s32.totalorder %s47, %s50
      %p56 = scmp.eq.s32.totalorder %s14, 0
      %p57 = por %p55, %p56
      %p58 = scmp.ne.s32.totalorder %s47, %s50
      %p59 = scmp.eq.s32.totalorder %s19, 1
      %p60 = por %p58, %p59
      %p61 = scmp.ne.s32.totalorder %s50, %s51
      %p62 = scmp.eq.s32.totalorder %s19, 0
      %p63 = por %p61, %p62
      %p64 = scmp.ne.s32.totalorder %s50, %s51
      %p65 = scmp.eq.s32.totalorder %s20, 1
      %p66 = por %p64, %p65
      %p68 = scmp.ne.s32.totalorder %s51, %s67
      %p69 = scmp.eq.s32.totalorder %s20, 0
      %p70 = por %p68, %p69
      %s71 = ssub.s32 %s21, %s40
      %p72 = scmp.eq.s32.totalorder %s71, 0
      %s74 = sadd.s32 %s73, 1
      %s75 = scalar_select %p72, %s73, %s74
      %p78 = pneg %p72
      %p79 = scmp.eq.s32.totalorder %s14, 1
      %p80 = por %p78, %p79
      %p81 = scmp.ne.s32.totalorder %s73, %s76
      %p82 = scmp.eq.s32.totalorder %s14, 0
      %p83 = por %p81, %p82
      %p84 = scmp.ne.s32.totalorder %s73, %s76
      %p85 = scmp.eq.s32.totalorder %s19, 1
      %p86 = por %p84, %p85
      %p87 = scmp.ne.s32.totalorder %s76, %s77
      %p88 = scmp.eq.s32.totalorder %s19, 0
      %p89 = por %p87, %p88
      %p90 = scmp.ne.s32.totalorder %s76, %s77
      %p91 = scmp.eq.s32.totalorder %s20, 1
      %p92 = por %p90, %p91
      %p94 = scmp.ne.s32.totalorder %s77, %s93
      %p95 = scmp.eq.s32.totalorder %s20, 0
      %p96 = por %p94, %p95
      %s97 = ssub.s32 %s21, %s40
      %s98 = ssub.s32 %s22, %s36
      %s99 = sor.u32 %s97, %s98
      %p100 = scmp.eq.s32.totalorder %s99, 0
      %s102 = sadd.s32 %s101, 1
      %s103 = scalar_select %p100, %s101, %s102
      %p106 = pneg %p100
      %p107 = scmp.eq.s32.totalorder %s14, 1
      %p108 = por %p106, %p107
      %p109 = scmp.ne.s32.totalorder %s101, %s104
      %p110 = scmp.eq.s32.totalorder %s14, 0
      %p111 = por %p109, %p110
      %p112 = scmp.ne.s32.totalorder %s101, %s104
      %p113 = scmp.eq.s32.totalorder %s19, 1
      %p114 = por %p112, %p113
      %p115 = scmp.ne.s32.totalorder %s104, %s105
      %p116 = scmp.eq.s32.totalorder %s19, 0
      %p117 = por %p115, %p116
      %p118 = scmp.ne.s32.totalorder %s104, %s105
      %p119 = scmp.eq.s32.totalorder %s20, 1
      %p120 = por %p118, %p119
      %p122 = scmp.ne.s32.totalorder %s105, %s121
      %p123 = scmp.eq.s32.totalorder %s20, 0
      %p124 = por %p122, %p123
      %p125 = scmp.le.s32.totalorder 1, %s14
      %p126 = scmp.lt.s32.totalorder %s14, 3
      %p127 = pnand %p125, %p126
      %p128 = pneg %p127
      // Predicated region
      $region9: #{tpu_custom_call.1} parent=5 // pred_check
        _
      $region10: #{tpu_custom_call.1} parent=5 // pred_check_branch
        %130 = sbr.rel (%p127) target = $region12
      $region11: #{tpu_custom_call.1} parent=5 // pred_region
        %s131 = ssub.s32 %s14, 1
      $region12: #{tpu_custom_call.1} parent=5 // pred_fallthru
        _
      %p132 = scmp.lt.s32.totalorder %s14, 2
      // Predicated region
      $region13: #{tpu_custom_call.1} parent=5 // pred_check
        %p133 = pneg %p132
      $region14: #{tpu_custom_call.1} parent=5 // pred_check_branch
        %135 = sbr.rel (%p133) target = $region16
      $region15: #{tpu_custom_call.1} parent=5 // pred_region
        // Predicated region
        $region17: #{tpu_custom_call.1} parent=15 // pred_check
          %p136 = pneg %p57
        $region18: #{tpu_custom_call.1} parent=15 // pred_check_branch
          %138 = sbr.rel (%p136) target = $region20
        $region19: #{tpu_custom_call.1} parent=15 // pred_region
          %s139 = sand.u32 %s47, 1
          %s140 = scalar_lea.sflag [#allocation3], %s139
          %s141 = sand.u32 %s47, 1
          %s142 = smul.addr %s141, 512
          %s143 = scalar_lea.vmem [#allocation2], %s142
          %s144 = smul.u32 4, %s23
          %s145 = smul.u32 16, %s22
          %s147 = ssub.s32 8192, 8192
          %148 = vsyncadd %s140, %s147
          %s149 = smul.addr %s144, 16
          %s150 = sadd.s32 %s145, %s149
          %s151 = smul.addr %s21, 64
          %s152 = sadd.s32 %s150, %s151
          %s153 = smul.addr %s152, 128
          %s154 = scalar_lea.hbm %s0, %s153
          %s155 = sshll.u32 %s143, 4
          %s156 = int_to_ptr.vmem [resolvable:$true] %s155
          %161 = dma.hbm_to_vmem [thread:$0]  %s154, 8192, %s156, %s140, 128, 128, 8
        $region20: #{tpu_custom_call.1} parent=15 // pred_fallthru
          _
        // Predicated region
        $region21: #{tpu_custom_call.1} parent=15 // pred_check
          %p162 = pneg %p83
        $region22: #{tpu_custom_call.1} parent=15 // pred_check_branch
          %164 = sbr.rel (%p162) target = $region24
        $region23: #{tpu_custom_call.1} parent=15 // pred_region
          %p165 = scmp.lt.s32.totalorder %s21, 1
          %s166 = scalar_select %p165, %s21, 1
          %s167 = scalar_lea.vmem %s1, %s166
        $region24: #{tpu_custom_call.1} parent=15 // pred_fallthru
          _
      $region16: #{tpu_custom_call.1} parent=5 // pred_fallthru
        _
      %p168 = scmp.le.s32.totalorder 1, %s14
      %p169 = scmp.lt.s32.totalorder %s14, 3
      %p170 = pnand %p168, %p169
      %p171 = pneg %p170
      // Predicated region
      $region25: #{tpu_custom_call.1} parent=5 // pred_check
        _
      $region26: #{tpu_custom_call.1} parent=5 // pred_check_branch
        %173 = sbr.rel (%p170) target = $region28
      $region27: #{tpu_custom_call.1} parent=5 // pred_region
        %s174 = ssub.s32 %s14, 1
        %s175 = sand.u32 %s50, 1
        %s176 = scalar_lea.sflag [#allocation3], %s175
        %s177 = sand.u32 %s50, 1
        %s178 = smul.addr %s177, 512
        %s179 = scalar_lea.vmem [#allocation2], %s178
        // Predicated region
        $region29: #{tpu_custom_call.1} parent=27 // pred_check
          %p180 = pneg %p63
        $region30: #{tpu_custom_call.1} parent=27 // pred_check_branch
          %182 = sbr.rel (%p180) target = $region32
        $region31: #{tpu_custom_call.1} parent=27 // pred_region
          %183 = dma.done %s176, 8192
        $region32: #{tpu_custom_call.1} parent=27 // pred_fallthru
          _
        %s184 = sand.u32 %s50, 1
        %s185 = scalar_lea.sflag [#allocation3], %s184
        %s186 = sand.u32 %s50, 1
        %s187 = smul.addr %s186, 512
        %s188 = scalar_lea.vmem [#allocation2], %s187
        %p189 = pneg %p63
        %p190 = pneg %p60
        %p191 = scmp.lt.s32.totalorder %s24, 1
        %s192 = scalar_select %p191, %s24, 1
        %s193 = scalar_lea.vmem %s1, %s192
        %p194 = pneg %p89
        %p195 = pneg %p86
        %p196 = pneg %p117
        %p197 = pneg %p114
        %s198 = sand.u32 %s104, 1
        %s199 = scalar_lea.sflag [#allocation4], %s198
        %s200 = sand.u32 %s104, 1
        %s201 = scalar_lea.vmem [#allocation5], %s200
        %s202 = smul.u32 4, %s26
        %s203 = smul.u32 16, %s25
        %p204 = scmp.lt.s32.totalorder %s24, 1
        %s205 = scalar_select %p204, %s24, 1
        %s206 = scalar_lea.vmem %s1, %s205
        %p207 = scmp.eq.s32.totalorder %s26, 0
        // Predicated region
        $region33: #{tpu_custom_call.1} parent=27 // pred_check
          %p208 = pneg %p207
        $region34: #{tpu_custom_call.1} parent=27 // pred_check_branch
          %210 = sbr.rel (%p208) target = $region36
        $region35: #{tpu_custom_call.1} parent=27 // pred_region
          %211 = vst [vmem:[%s201] sm:$0x1] 0.0
        $region36: #{tpu_custom_call.1} parent=27 // pred_fallthru
          _
        %v212 = vld [vmem:[%s179] sm:$0xff]
        %v213 = vld [vmem:[%s179 + $0x8] sm:$0xff]
        %v214 = vld [vmem:[%s179 + $0x10] sm:$0xff]
        %v215 = vld [vmem:[%s179 + $0x18] sm:$0xff]
        %v216 = vld [vmem:[%s179 + $0x20] sm:$0xff]
        %v217 = vld [vmem:[%s179 + $0x28] sm:$0xff]
        %v218 = vld [vmem:[%s179 + $0x30] sm:$0xff]
        %v219 = vld [vmem:[%s179 + $0x38] sm:$0xff]
        %v220 = vld [vmem:[%s179 + $0x40] sm:$0xff]
        %v221 = vld [vmem:[%s179 + $0x48] sm:$0xff]
        %v222 = vld [vmem:[%s179 + $0x50] sm:$0xff]
        %v223 = vld [vmem:[%s179 + $0x58] sm:$0xff]
        %v224 = vld [vmem:[%s179 + $0x60] sm:$0xff]
        %v225 = vld [vmem:[%s179 + $0x68] sm:$0xff]
        %v226 = vld [vmem:[%s179 + $0x70] sm:$0xff]
        %v227 = vld [vmem:[%s179 + $0x78] sm:$0xff]
        %v228 = vld [vmem:[%s179 + $0x80] sm:$0xff]
        %v229 = vld [vmem:[%s179 + $0x88] sm:$0xff]
        %v230 = vld [vmem:[%s179 + $0x90] sm:$0xff]
        %v231 = vld [vmem:[%s179 + $0x98] sm:$0xff]
        %v232 = vld [vmem:[%s179 + $0xa0] sm:$0xff]
        %v233 = vld [vmem:[%s179 + $0xa8] sm:$0xff]
        %v234 = vld [vmem:[%s179 + $0xb0] sm:$0xff]
        %v235 = vld [vmem:[%s179 + $0xb8] sm:$0xff]
        %v236 = vld [vmem:[%s179 + $0xc0] sm:$0xff]
        %v237 = vld [vmem:[%s179 + $0xc8] sm:$0xff]
        %v238 = vld [vmem:[%s179 + $0xd0] sm:$0xff]
        %v239 = vld [vmem:[%s179 + $0xd8] sm:$0xff]
        %v240 = vld [vmem:[%s179 + $0xe0] sm:$0xff]
        %v241 = vld [vmem:[%s179 + $0xe8] sm:$0xff]
        %v242 = vld [vmem:[%s179 + $0xf0] sm:$0xff]
        %v243 = vld [vmem:[%s179 + $0xf8] sm:$0xff]
        %v244 = vld [vmem:[%s179 + $0x100] sm:$0xff]
        %v245 = vld [vmem:[%s179 + $0x108] sm:$0xff]
        %v246 = vld [vmem:[%s179 + $0x110] sm:$0xff]
        %v247 = vld [vmem:[%s179 + $0x118] sm:$0xff]
        %v248 = vld [vmem:[%s179 + $0x120] sm:$0xff]
        %v249 = vld [vmem:[%s179 + $0x128] sm:$0xff]
        %v250 = vld [vmem:[%s179 + $0x130] sm:$0xff]
        %v251 = vld [vmem:[%s179 + $0x138] sm:$0xff]
        %v252 = vld [vmem:[%s179 + $0x140] sm:$0xff]
        %v253 = vld [vmem:[%s179 + $0x148] sm:$0xff]
        %v254 = vld [vmem:[%s179 + $0x150] sm:$0xff]
        %v255 = vld [vmem:[%s179 + $0x158] sm:$0xff]
        %v256 = vld [vmem:[%s179 + $0x160] sm:$0xff]
        %v257 = vld [vmem:[%s179 + $0x168] sm:$0xff]
        %v258 = vld [vmem:[%s179 + $0x170] sm:$0xff]
        %v259 = vld [vmem:[%s179 + $0x178] sm:$0xff]
        %v260 = vld [vmem:[%s179 + $0x180] sm:$0xff]
        %v261 = vld [vmem:[%s179 + $0x188] sm:$0xff]
        %v262 = vld [vmem:[%s179 + $0x190] sm:$0xff]
        %v263 = vld [vmem:[%s179 + $0x198] sm:$0xff]
        %v264 = vld [vmem:[%s179 + $0x1a0] sm:$0xff]
        %v265 = vld [vmem:[%s179 + $0x1a8] sm:$0xff]
        %v266 = vld [vmem:[%s179 + $0x1b0] sm:$0xff]
        %v267 = vld [vmem:[%s179 + $0x1b8] sm:$0xff]
        %v268 = vld [vmem:[%s179 + $0x1c0] sm:$0xff]
        %v269 = vld [vmem:[%s179 + $0x1c8] sm:$0xff]
        %v270 = vld [vmem:[%s179 + $0x1d0] sm:$0xff]
        %v271 = vld [vmem:[%s179 + $0x1d8] sm:$0xff]
        %v272 = vld [vmem:[%s179 + $0x1e0] sm:$0xff]
        %v273 = vld [vmem:[%s179 + $0x1e8] sm:$0xff]
        %v274 = vld [vmem:[%s179 + $0x1f0] sm:$0xff]
        %v275 = vld [vmem:[%s179 + $0x1f8] sm:$0xff]
        %v276 = vld [vmem:[%s206] sm:$0x1]
        %v278 = vlaneseq
        %v279 = vshrl.u32 %v278, 7
        %v280 = vsub.s32 0, %v279
        %v281 = vrot.slane %v276, %v280
        %v283 = vmul.f32 %v212, %v281
        %v284 = vmul.f32 %v213, %v281
        %v285 = vmul.f32 %v214, %v281
        %v286 = vmul.f32 %v215, %v281
        %v287 = vmul.f32 %v216, %v281
        %v288 = vmul.f32 %v217, %v281
        %v289 = vmul.f32 %v218, %v281
        %v290 = vmul.f32 %v219, %v281
        %v291 = vmul.f32 %v220, %v281
        %v292 = vmul.f32 %v221, %v281
        %v293 = vmul.f32 %v222, %v281
        %v294 = vmul.f32 %v223, %v281
        %v295 = vmul.f32 %v224, %v281
        %v296 = vmul.f32 %v225, %v281
        %v297 = vmul.f32 %v226, %v281
        %v298 = vmul.f32 %v227, %v281
        %v299 = vmul.f32 %v228, %v281
        %v300 = vmul.f32 %v229, %v281
        %v301 = vmul.f32 %v230, %v281
        %v302 = vmul.f32 %v231, %v281
        %v303 = vmul.f32 %v232, %v281
        %v304 = vmul.f32 %v233, %v281
        %v305 = vmul.f32 %v234, %v281
        %v306 = vmul.f32 %v235, %v281
        %v307 = vmul.f32 %v236, %v281
        %v308 = vmul.f32 %v237, %v281
        %v309 = vmul.f32 %v238, %v281
        %v310 = vmul.f32 %v239, %v281
        %v311 = vmul.f32 %v240, %v281
        %v312 = vmul.f32 %v241, %v281
        %v313 = vmul.f32 %v242, %v281
        %v314 = vmul.f32 %v243, %v281
        %v315 = vmul.f32 %v244, %v281
        %v316 = vmul.f32 %v245, %v281
        %v317 = vmul.f32 %v246, %v281
        %v318 = vmul.f32 %v247, %v281
        %v319 = vmul.f32 %v248, %v281
        %v320 = vmul.f32 %v249, %v281
        %v321 = vmul.f32 %v250, %v281
        %v322 = vmul.f32 %v251, %v281
        %v323 = vmul.f32 %v252, %v281
        %v324 = vmul.f32 %v253, %v281
        %v325 = vmul.f32 %v254, %v281
        %v326 = vmul.f32 %v255, %v281
        %v327 = vmul.f32 %v256, %v281
        %v328 = vmul.f32 %v257, %v281
        %v329 = vmul.f32 %v258, %v281
        %v330 = vmul.f32 %v259, %v281
        %v331 = vmul.f32 %v260, %v281
        %v332 = vmul.f32 %v261, %v281
        %v333 = vmul.f32 %v262, %v281
        %v334 = vmul.f32 %v263, %v281
        %v335 = vmul.f32 %v264, %v281
        %v336 = vmul.f32 %v265, %v281
        %v337 = vmul.f32 %v266, %v281
        %v338 = vmul.f32 %v267, %v281
        %v339 = vmul.f32 %v268, %v281
        %v340 = vmul.f32 %v269, %v281
        %v341 = vmul.f32 %v270, %v281
        %v342 = vmul.f32 %v271, %v281
        %v343 = vmul.f32 %v272, %v281
        %v344 = vmul.f32 %v273, %v281
        %v345 = vmul.f32 %v274, %v281
        %v346 = vmul.f32 %v275, %v281
        %v347 = vmul.f32 %v283, 1.442695
        %v348 = vpow.pop %v347
        %v349 = vmul.f32 %v284, 1.442695
        %v350 = vpow.pop %v349
        %v351 = vmul.f32 %v285, 1.442695
        %v352 = vpow.pop %v351
        %v353 = vmul.f32 %v286, 1.442695
        %v354 = vpow.pop %v353
        %v355 = vmul.f32 %v287, 1.442695
        %v356 = vpow.pop %v355
        %v357 = vmul.f32 %v288, 1.442695
        %v358 = vpow.pop %v357
        %v359 = vmul.f32 %v289, 1.442695
        %v360 = vpow.pop %v359
        %v361 = vmul.f32 %v290, 1.442695
        %v362 = vpow.pop %v361
        %v363 = vmul.f32 %v291, 1.442695
        %v364 = vpow.pop %v363
        %v365 = vmul.f32 %v292, 1.442695
        %v366 = vpow.pop %v365
        %v367 = vmul.f32 %v293, 1.442695
        %v368 = vpow.pop %v367
        %v369 = vmul.f32 %v294, 1.442695
        %v370 = vpow.pop %v369
        %v371 = vmul.f32 %v295, 1.442695
        %v372 = vpow.pop %v371
        %v373 = vmul.f32 %v296, 1.442695
        %v374 = vpow.pop %v373
        %v375 = vmul.f32 %v297, 1.442695
        %v376 = vpow.pop %v375
        %v377 = vmul.f32 %v298, 1.442695
        %v378 = vpow.pop %v377
        %v379 = vmul.f32 %v299, 1.442695
        %v380 = vpow.pop %v379
        %v381 = vmul.f32 %v300, 1.442695
        %v382 = vpow.pop %v381
        %v383 = vmul.f32 %v301, 1.442695
        %v384 = vpow.pop %v383
        %v385 = vmul.f32 %v302, 1.442695
        %v386 = vpow.pop %v385
        %v387 = vmul.f32 %v303, 1.442695
        %v388 = vpow.pop %v387
        %v389 = vmul.f32 %v304, 1.442695
        %v390 = vpow.pop %v389
        %v391 = vmul.f32 %v305, 1.442695
        %v392 = vpow.pop %v391
        %v393 = vmul.f32 %v306, 1.442695
        %v394 = vpow.pop %v393
        %v395 = vmul.f32 %v307, 1.442695
        %v396 = vpow.pop %v395
        %v397 = vmul.f32 %v308, 1.442695
        %v398 = vpow.pop %v397
        %v399 = vmul.f32 %v309, 1.442695
        %v400 = vpow.pop %v399
        %v401 = vmul.f32 %v310, 1.442695
        %v402 = vpow.pop %v401
        %v403 = vmul.f32 %v311, 1.442695
        %v404 = vpow.pop %v403
        %v405 = vmul.f32 %v312, 1.442695
        %v406 = vpow.pop %v405
        %v407 = vmul.f32 %v313, 1.442695
        %v408 = vpow.pop %v407
        %v409 = vmul.f32 %v314, 1.442695
        %v410 = vpow.pop %v409
        %v411 = vmul.f32 %v315, 1.442695
        %v412 = vpow.pop %v411
        %v413 = vmul.f32 %v316, 1.442695
        %v414 = vpow.pop %v413
        %v415 = vmul.f32 %v317, 1.442695
        %v416 = vpow.pop %v415
        %v417 = vmul.f32 %v318, 1.442695
        %v418 = vpow.pop %v417
        %v419 = vmul.f32 %v319, 1.442695
        %v420 = vpow.pop %v419
        %v421 = vmul.f32 %v320, 1.442695
        %v422 = vpow.pop %v421
        %v423 = vmul.f32 %v321, 1.442695
        %v424 = vpow.pop %v423
        %v425 = vmul.f32 %v322, 1.442695
        %v426 = vpow.pop %v425
        %v427 = vmul.f32 %v323, 1.442695
        %v428 = vpow.pop %v427
        %v429 = vmul.f32 %v324, 1.442695
        %v430 = vpow.pop %v429
        %v431 = vmul.f32 %v325, 1.442695
        %v432 = vpow.pop %v431
        %v433 = vmul.f32 %v326, 1.442695
        %v434 = vpow.pop %v433
        %v435 = vmul.f32 %v327, 1.442695
        %v436 = vpow.pop %v435
        %v437 = vmul.f32 %v328, 1.442695
        %v438 = vpow.pop %v437
        %v439 = vmul.f32 %v329, 1.442695
        %v440 = vpow.pop %v439
        %v441 = vmul.f32 %v330, 1.442695
        %v442 = vpow.pop %v441
        %v443 = vmul.f32 %v331, 1.442695
        %v444 = vpow.pop %v443
        %v445 = vmul.f32 %v332, 1.442695
        %v446 = vpow.pop %v445
        %v447 = vmul.f32 %v333, 1.442695
        %v448 = vpow.pop %v447
        %v449 = vmul.f32 %v334, 1.442695
        %v450 = vpow.pop %v449
        %v451 = vmul.f32 %v335, 1.442695
        %v452 = vpow.pop %v451
        %v453 = vmul.f32 %v336, 1.442695
        %v454 = vpow.pop %v453
        %v455 = vmul.f32 %v337, 1.442695
        %v456 = vpow.pop %v455
        %v457 = vmul.f32 %v338, 1.442695
        %v458 = vpow.pop %v457
        %v459 = vmul.f32 %v339, 1.442695
        %v460 = vpow.pop %v459
        %v461 = vmul.f32 %v340, 1.442695
        %v462 = vpow.pop %v461
        %v463 = vmul.f32 %v341, 1.442695
        %v464 = vpow.pop %v463
        %v465 = vmul.f32 %v342, 1.442695
        %v466 = vpow.pop %v465
        %v467 = vmul.f32 %v343, 1.442695
        %v468 = vpow.pop %v467
        %v469 = vmul.f32 %v344, 1.442695
        %v470 = vpow.pop %v469
        %v471 = vmul.f32 %v345, 1.442695
        %v472 = vpow.pop %v471
        %v473 = vmul.f32 %v346, 1.442695
        %v474 = vpow.pop %v473
        %475 = vadd.xlane.f32.xlu0 %v348
        %v476 = vpop.xlane.xlu0 %475
        %477 = vadd.xlane.f32.xlu0 %v350
        %v478 = vpop.xlane.xlu0 %477
        %479 = vadd.xlane.f32.xlu0 %v352
        %v480 = vpop.xlane.xlu0 %479
        %481 = vadd.xlane.f32.xlu0 %v354
        %v482 = vpop.xlane.xlu0 %481
        %483 = vadd.xlane.f32.xlu0 %v356
        %v484 = vpop.xlane.xlu0 %483
        %485 = vadd.xlane.f32.xlu0 %v358
        %v486 = vpop.xlane.xlu0 %485
        %487 = vadd.xlane.f32.xlu0 %v360
        %v488 = vpop.xlane.xlu0 %487
        %489 = vadd.xlane.f32.xlu0 %v362
        %v490 = vpop.xlane.xlu0 %489
        %491 = vadd.xlane.f32.xlu0 %v364
        %v492 = vpop.xlane.xlu0 %491
        %493 = vadd.xlane.f32.xlu0 %v366
        %v494 = vpop.xlane.xlu0 %493
        %495 = vadd.xlane.f32.xlu0 %v368
        %v496 = vpop.xlane.xlu0 %495
        %497 = vadd.xlane.f32.xlu0 %v370
        %v498 = vpop.xlane.xlu0 %497
        %499 = vadd.xlane.f32.xlu0 %v372
        %v500 = vpop.xlane.xlu0 %499
        %501 = vadd.xlane.f32.xlu0 %v374
        %v502 = vpop.xlane.xlu0 %501
        %503 = vadd.xlane.f32.xlu0 %v376
        %v504 = vpop.xlane.xlu0 %503
        %505 = vadd.xlane.f32.xlu0 %v378
        %v506 = vpop.xlane.xlu0 %505
        %507 = vadd.xlane.f32.xlu0 %v380
        %v508 = vpop.xlane.xlu0 %507
        %509 = vadd.xlane.f32.xlu0 %v382
        %v510 = vpop.xlane.xlu0 %509
        %511 = vadd.xlane.f32.xlu0 %v384
        %v512 = vpop.xlane.xlu0 %511
        %513 = vadd.xlane.f32.xlu0 %v386
        %v514 = vpop.xlane.xlu0 %513
        %515 = vadd.xlane.f32.xlu0 %v388
        %v516 = vpop.xlane.xlu0 %515
        %517 = vadd.xlane.f32.xlu0 %v390
        %v518 = vpop.xlane.xlu0 %517
        %519 = vadd.xlane.f32.xlu0 %v392
        %v520 = vpop.xlane.xlu0 %519
        %521 = vadd.xlane.f32.xlu0 %v394
        %v522 = vpop.xlane.xlu0 %521
        %523 = vadd.xlane.f32.xlu0 %v396
        %v524 = vpop.xlane.xlu0 %523
        %525 = vadd.xlane.f32.xlu0 %v398
        %v526 = vpop.xlane.xlu0 %525
        %527 = vadd.xlane.f32.xlu0 %v400
        %v528 = vpop.xlane.xlu0 %527
        %529 = vadd.xlane.f32.xlu0 %v402
        %v530 = vpop.xlane.xlu0 %529
        %531 = vadd.xlane.f32.xlu0 %v404
        %v532 = vpop.xlane.xlu0 %531
        %533 = vadd.xlane.f32.xlu0 %v406
        %v534 = vpop.xlane.xlu0 %533
        %535 = vadd.xlane.f32.xlu0 %v408
        %v536 = vpop.xlane.xlu0 %535
        %537 = vadd.xlane.f32.xlu0 %v410
        %v538 = vpop.xlane.xlu0 %537
        %539 = vadd.xlane.f32.xlu0 %v412
        %v540 = vpop.xlane.xlu0 %539
        %541 = vadd.xlane.f32.xlu0 %v414
        %v542 = vpop.xlane.xlu0 %541
        %543 = vadd.xlane.f32.xlu0 %v416
        %v544 = vpop.xlane.xlu0 %543
        %545 = vadd.xlane.f32.xlu0 %v418
        %v546 = vpop.xlane.xlu0 %545
        %547 = vadd.xlane.f32.xlu0 %v420
        %v548 = vpop.xlane.xlu0 %547
        %549 = vadd.xlane.f32.xlu0 %v422
        %v550 = vpop.xlane.xlu0 %549
        %551 = vadd.xlane.f32.xlu0 %v424
        %v552 = vpop.xlane.xlu0 %551
        %553 = vadd.xlane.f32.xlu0 %v426
        %v554 = vpop.xlane.xlu0 %553
        %555 = vadd.xlane.f32.xlu0 %v428
        %v556 = vpop.xlane.xlu0 %555
        %557 = vadd.xlane.f32.xlu0 %v430
        %v558 = vpop.xlane.xlu0 %557
        %559 = vadd.xlane.f32.xlu0 %v432
        %v560 = vpop.xlane.xlu0 %559
        %561 = vadd.xlane.f32.xlu0 %v434
        %v562 = vpop.xlane.xlu0 %561
        %563 = vadd.xlane.f32.xlu0 %v436
        %v564 = vpop.xlane.xlu0 %563
        %565 = vadd.xlane.f32.xlu0 %v438
        %v566 = vpop.xlane.xlu0 %565
        %567 = vadd.xlane.f32.xlu0 %v440
        %v568 = vpop.xlane.xlu0 %567
        %569 = vadd.xlane.f32.xlu0 %v442
        %v570 = vpop.xlane.xlu0 %569
        %571 = vadd.xlane.f32.xlu0 %v444
        %v572 = vpop.xlane.xlu0 %571
        %573 = vadd.xlane.f32.xlu0 %v446
        %v574 = vpop.xlane.xlu0 %573
        %575 = vadd.xlane.f32.xlu0 %v448
        %v576 = vpop.xlane.xlu0 %575
        %577 = vadd.xlane.f32.xlu0 %v450
        %v578 = vpop.xlane.xlu0 %577
        %579 = vadd.xlane.f32.xlu0 %v452
        %v580 = vpop.xlane.xlu0 %579
        %581 = vadd.xlane.f32.xlu0 %v454
        %v582 = vpop.xlane.xlu0 %581
        %583 = vadd.xlane.f32.xlu0 %v456
        %v584 = vpop.xlane.xlu0 %583
        %585 = vadd.xlane.f32.xlu0 %v458
        %v586 = vpop.xlane.xlu0 %585
        %587 = vadd.xlane.f32.xlu0 %v460
        %v588 = vpop.xlane.xlu0 %587
        %589 = vadd.xlane.f32.xlu0 %v462
        %v590 = vpop.xlane.xlu0 %589
        %591 = vadd.xlane.f32.xlu0 %v464
        %v592 = vpop.xlane.xlu0 %591
        %593 = vadd.xlane.f32.xlu0 %v466
        %v594 = vpop.xlane.xlu0 %593
        %595 = vadd.xlane.f32.xlu0 %v468
        %v596 = vpop.xlane.xlu0 %595
        %597 = vadd.xlane.f32.xlu0 %v470
        %v598 = vpop.xlane.xlu0 %597
        %599 = vadd.xlane.f32.xlu0 %v472
        %v600 = vpop.xlane.xlu0 %599
        %601 = vadd.xlane.f32.xlu0 %v474
        %v602 = vpop.xlane.xlu0 %601
        %v603 = vrcp.pop %v476
        %v604 = vrcp.pop %v478
        %v605 = vrcp.pop %v480
        %v606 = vrcp.pop %v482
        %v607 = vrcp.pop %v484
        %v608 = vrcp.pop %v486
        %v609 = vrcp.pop %v488
        %v610 = vrcp.pop %v490
        %v611 = vrcp.pop %v492
        %v612 = vrcp.pop %v494
        %v613 = vrcp.pop %v496
        %v614 = vrcp.pop %v498
        %v615 = vrcp.pop %v500
        %v616 = vrcp.pop %v502
        %v617 = vrcp.pop %v504
        %v618 = vrcp.pop %v506
        %v619 = vrcp.pop %v508
        %v620 = vrcp.pop %v510
        %v621 = vrcp.pop %v512
        %v622 = vrcp.pop %v514
        %v623 = vrcp.pop %v516
        %v624 = vrcp.pop %v518
        %v625 = vrcp.pop %v520
        %v626 = vrcp.pop %v522
        %v627 = vrcp.pop %v524
        %v628 = vrcp.pop %v526
        %v629 = vrcp.pop %v528
        %v630 = vrcp.pop %v530
        %v631 = vrcp.pop %v532
        %v632 = vrcp.pop %v534
        %v633 = vrcp.pop %v536
        %v634 = vrcp.pop %v538
        %v635 = vrcp.pop %v540
        %v636 = vrcp.pop %v542
        %v637 = vrcp.pop %v544
        %v638 = vrcp.pop %v546
        %v639 = vrcp.pop %v548
        %v640 = vrcp.pop %v550
        %v641 = vrcp.pop %v552
        %v642 = vrcp.pop %v554
        %v643 = vrcp.pop %v556
        %v644 = vrcp.pop %v558
        %v645 = vrcp.pop %v560
        %v646 = vrcp.pop %v562
        %v647 = vrcp.pop %v564
        %v648 = vrcp.pop %v566
        %v649 = vrcp.pop %v568
        %v650 = vrcp.pop %v570
        %v651 = vrcp.pop %v572
        %v652 = vrcp.pop %v574
        %v653 = vrcp.pop %v576
        %v654 = vrcp.pop %v578
        %v655 = vrcp.pop %v580
        %v656 = vrcp.pop %v582
        %v657 = vrcp.pop %v584
        %v658 = vrcp.pop %v586
        %v659 = vrcp.pop %v588
        %v660 = vrcp.pop %v590
        %v661 = vrcp.pop %v592
        %v662 = vrcp.pop %v594
        %v663 = vrcp.pop %v596
        %v664 = vrcp.pop %v598
        %v665 = vrcp.pop %v600
        %v666 = vrcp.pop %v602
        %667 = vxpose.xlu0.b32.start [1/16] %v603, 128
        %668 = vxpose.xlu0.b32.cont [2/16] %v604, 128
        %669 = vxpose.xlu0.b32.cont [3/16] %v605, 128
        %670 = vxpose.xlu0.b32.cont [4/16] %v606, 128
        %671 = vxpose.xlu0.b32.cont [5/16] %v607, 128
        %672 = vxpose.xlu0.b32.cont [6/16] %v608, 128
        %673 = vxpose.xlu0.b32.cont [7/16] %v609, 128
        %674 = vxpose.xlu0.b32.cont [8/16] %v610, 128
        %675 = vxpose.xlu0.b32.cont [9/16] %v611, 128
        %676 = vxpose.xlu0.b32.cont [10/16] %v612, 128
        %677 = vxpose.xlu0.b32.cont [11/16] %v613, 128
        %678 = vxpose.xlu0.b32.cont [12/16] %v614, 128
        %679 = vxpose.xlu0.b32.cont [13/16] %v615, 128
        %680 = vxpose.xlu0.b32.cont [14/16] %v616, 128
        %681 = vxpose.xlu0.b32.cont [15/16] %v617, 128
        %682 = vxpose.xlu0.b32.end [16/16] %v618, 128
        %v683 = vpop.trf.xlu0
        %v684 = vpop.trf.xlu0
        %v685 = vpop.trf.xlu0
        %v686 = vpop.trf.xlu0
        %v687 = vpop.trf.xlu0
        %v688 = vpop.trf.xlu0
        %v689 = vpop.trf.xlu0
        %v690 = vpop.trf.xlu0
        %v691 = vpop.trf.xlu0
        %v692 = vpop.trf.xlu0
        %v693 = vpop.trf.xlu0
        %v694 = vpop.trf.xlu0
        %v695 = vpop.trf.xlu0
        %v696 = vpop.trf.xlu0
        %v697 = vpop.trf.xlu0
        %v698 = vpop.trf.xlu0
        %699 = vxpose.xlu0.b32.start [1/16] %v619, 128
        %700 = vxpose.xlu0.b32.cont [2/16] %v620, 128
        %701 = vxpose.xlu0.b32.cont [3/16] %v621, 128
        %702 = vxpose.xlu0.b32.cont [4/16] %v622, 128
        %703 = vxpose.xlu0.b32.cont [5/16] %v623, 128
        %704 = vxpose.xlu0.b32.cont [6/16] %v624, 128
        %705 = vxpose.xlu0.b32.cont [7/16] %v625, 128
        %706 = vxpose.xlu0.b32.cont [8/16] %v626, 128
        %707 = vxpose.xlu0.b32.cont [9/16] %v627, 128
        %708 = vxpose.xlu0.b32.cont [10/16] %v628, 128
        %709 = vxpose.xlu0.b32.cont [11/16] %v629, 128
        %710 = vxpose.xlu0.b32.cont [12/16] %v630, 128
        %711 = vxpose.xlu0.b32.cont [13/16] %v631, 128
        %712 = vxpose.xlu0.b32.cont [14/16] %v632, 128
        %713 = vxpose.xlu0.b32.cont [15/16] %v633, 128
        %714 = vxpose.xlu0.b32.end [16/16] %v634, 128
        %v715 = vpop.trf.xlu0
        %v716 = vpop.trf.xlu0
        %v717 = vpop.trf.xlu0
        %v718 = vpop.trf.xlu0
        %v719 = vpop.trf.xlu0
        %v720 = vpop.trf.xlu0
        %v721 = vpop.trf.xlu0
        %v722 = vpop.trf.xlu0
        %v723 = vpop.trf.xlu0
        %v724 = vpop.trf.xlu0
        %v725 = vpop.trf.xlu0
        %v726 = vpop.trf.xlu0
        %v727 = vpop.trf.xlu0
        %v728 = vpop.trf.xlu0
        %v729 = vpop.trf.xlu0
        %v730 = vpop.trf.xlu0
        %731 = vxpose.xlu0.b32.start [1/16] %v635, 128
        %732 = vxpose.xlu0.b32.cont [2/16] %v636, 128
        %733 = vxpose.xlu0.b32.cont [3/16] %v637, 128
        %734 = vxpose.xlu0.b32.cont [4/16] %v638, 128
        %735 = vxpose.xlu0.b32.cont [5/16] %v639, 128
        %736 = vxpose.xlu0.b32.cont [6/16] %v640, 128
        %737 = vxpose.xlu0.b32.cont [7/16] %v641, 128
        %738 = vxpose.xlu0.b32.cont [8/16] %v642, 128
        %739 = vxpose.xlu0.b32.cont [9/16] %v643, 128
        %740 = vxpose.xlu0.b32.cont [10/16] %v644, 128
        %741 = vxpose.xlu0.b32.cont [11/16] %v645, 128
        %742 = vxpose.xlu0.b32.cont [12/16] %v646, 128
        %743 = vxpose.xlu0.b32.cont [13/16] %v647, 128
        %744 = vxpose.xlu0.b32.cont [14/16] %v648, 128
        %745 = vxpose.xlu0.b32.cont [15/16] %v649, 128
        %746 = vxpose.xlu0.b32.end [16/16] %v650, 128
        %v747 = vpop.trf.xlu0
        %v748 = vpop.trf.xlu0
        %v749 = vpop.trf.xlu0
        %v750 = vpop.trf.xlu0
        %v751 = vpop.trf.xlu0
        %v752 = vpop.trf.xlu0
        %v753 = vpop.trf.xlu0
        %v754 = vpop.trf.xlu0
        %v755 = vpop.trf.xlu0
        %v756 = vpop.trf.xlu0
        %v757 = vpop.trf.xlu0
        %v758 = vpop.trf.xlu0
        %v759 = vpop.trf.xlu0
        %v760 = vpop.trf.xlu0
        %v761 = vpop.trf.xlu0
        %v762 = vpop.trf.xlu0
        %763 = vxpose.xlu0.b32.start [1/16] %v651, 128
        %764 = vxpose.xlu0.b32.cont [2/16] %v652, 128
        %765 = vxpose.xlu0.b32.cont [3/16] %v653, 128
        %766 = vxpose.xlu0.b32.cont [4/16] %v654, 128
        %767 = vxpose.xlu0.b32.cont [5/16] %v655, 128
        %768 = vxpose.xlu0.b32.cont [6/16] %v656, 128
        %769 = vxpose.xlu0.b32.cont [7/16] %v657, 128
        %770 = vxpose.xlu0.b32.cont [8/16] %v658, 128
        %771 = vxpose.xlu0.b32.cont [9/16] %v659, 128
        %772 = vxpose.xlu0.b32.cont [10/16] %v660, 128
        %773 = vxpose.xlu0.b32.cont [11/16] %v661, 128
        %774 = vxpose.xlu0.b32.cont [12/16] %v662, 128
        %775 = vxpose.xlu0.b32.cont [13/16] %v663, 128
        %776 = vxpose.xlu0.b32.cont [14/16] %v664, 128
        %777 = vxpose.xlu0.b32.cont [15/16] %v665, 128
        %778 = vxpose.xlu0.b32.end [16/16] %v666, 128
        %v779 = vpop.trf.xlu0
        %v780 = vpop.trf.xlu0
        %v781 = vpop.trf.xlu0
        %v782 = vpop.trf.xlu0
        %v783 = vpop.trf.xlu0
        %v784 = vpop.trf.xlu0
        %v785 = vpop.trf.xlu0
        %v786 = vpop.trf.xlu0
        %v787 = vpop.trf.xlu0
        %v788 = vpop.trf.xlu0
        %v789 = vpop.trf.xlu0
        %v790 = vpop.trf.xlu0
        %v791 = vpop.trf.xlu0
        %v792 = vpop.trf.xlu0
        %v793 = vpop.trf.xlu0
        %v794 = vpop.trf.xlu0
        %795 = vmatprep.subr.mxu0 0.0
        %796 = vmatpush1.msra.mxu0 %v348
        %797 = vmatprep.subr.mxu0 0.0
        %798 = vmatpush1.msra.mxu0 %v350
        %799 = vmatprep.subr.mxu0 0.0
        %800 = vmatpush1.msra.mxu0 %v352
        %801 = vmatprep.subr.mxu0 0.0
        %802 = vmatpush1.msra.mxu0 %v354
        %803 = vmatprep.subr.mxu0 0.0
        %804 = vmatpush1.msra.mxu0 %v356
        %805 = vmatprep.subr.mxu0 0.0
        %806 = vmatpush1.msra.mxu0 %v358
        %807 = vmatprep.subr.mxu0 0.0
        %808 = vmatpush1.msra.mxu0 %v360
        %809 = vmatprep.subr.mxu0 0.0
        %810 = vmatpush1.msra.mxu0 %v362
        %811 = vmatprep.subr.mxu0 0.0
        %812 = vmatpush1.msra.mxu0 %v364
        %813 = vmatprep.subr.mxu0 0.0
        %814 = vmatpush1.msra.mxu0 %v366
        %815 = vmatprep.subr.mxu0 0.0
        %816 = vmatpush1.msra.mxu0 %v368
        %817 = vmatprep.subr.mxu0 0.0
        %818 = vmatpush1.msra.mxu0 %v370
        %819 = vmatprep.subr.mxu0 0.0
        %820 = vmatpush1.msra.mxu0 %v372
        %821 = vmatprep.subr.mxu0 0.0
        %822 = vmatpush1.msra.mxu0 %v374
        %823 = vmatprep.subr.mxu0 0.0
        %824 = vmatpush1.msra.mxu0 %v376
        %825 = vmatprep.subr.mxu0 0.0
        %826 = vmatpush1.msra.mxu0 %v378
        %827 = vmatprep.subr.mxu0 0.0
        %828 = vmatpush1.msra.mxu0 %v380
        %829 = vmatprep.subr.mxu0 0.0
        %830 = vmatpush1.msra.mxu0 %v382
        %831 = vmatprep.subr.mxu0 0.0
        %832 = vmatpush1.msra.mxu0 %v384
        %833 = vmatprep.subr.mxu0 0.0
        %834 = vmatpush1.msra.mxu0 %v386
        %835 = vmatprep.subr.mxu0 0.0
        %836 = vmatpush1.msra.mxu0 %v388
        %837 = vmatprep.subr.mxu0 0.0
        %838 = vmatpush1.msra.mxu0 %v390
        %839 = vmatprep.subr.mxu0 0.0
        %840 = vmatpush1.msra.mxu0 %v392
        %841 = vmatprep.subr.mxu0 0.0
        %842 = vmatpush1.msra.mxu0 %v394
        %843 = vmatprep.subr.mxu0 0.0
        %844 = vmatpush1.msra.mxu0 %v396
        %845 = vmatprep.subr.mxu0 0.0
        %846 = vmatpush1.msra.mxu0 %v398
        %847 = vmatprep.subr.mxu0 0.0
        %848 = vmatpush1.msra.mxu0 %v400
        %849 = vmatprep.subr.mxu0 0.0
        %850 = vmatpush1.msra.mxu0 %v402
        %851 = vmatprep.subr.mxu0 0.0
        %852 = vmatpush1.msra.mxu0 %v404
        %853 = vmatprep.subr.mxu0 0.0
        %854 = vmatpush1.msra.mxu0 %v406
        %855 = vmatprep.subr.mxu0 0.0
        %856 = vmatpush1.msra.mxu0 %v408
        %857 = vmatprep.subr.mxu0 0.0
        %858 = vmatpush1.msra.mxu0 %v410
        %859 = vmatprep.mubr.f32.mxu0 %v715
        %860 = vmatmul.mubr.f32.gmra.mrb[0].mxu0 %v683
        %v861 = vpop.f32.mrb[0].mxu0
        %v862 = vadd.f32 0.0, %v861
        %v863 = vpop.f32.mrb[0].mxu0
        %864 = vdwg.mxu0
        %865 = vmatprep.subr.mxu0 0.0
        %866 = vmatpush1.msra.mxu0 %v412
        %867 = vmatprep.subr.mxu0 0.0
        %868 = vmatpush1.msra.mxu0 %v414
        %869 = vmatprep.subr.mxu0 0.0
        %870 = vmatpush1.msra.mxu0 %v416
        %871 = vmatprep.subr.mxu0 0.0
        %872 = vmatpush1.msra.mxu0 %v418
        %873 = vmatprep.subr.mxu0 0.0
        %874 = vmatpush1.msra.mxu0 %v420
        %875 = vmatprep.subr.mxu0 0.0
        %876 = vmatpush1.msra.mxu0 %v422
        %877 = vmatprep.subr.mxu0 0.0
        %878 = vmatpush1.msra.mxu0 %v424
        %879 = vmatprep.subr.mxu0 0.0
        %880 = vmatpush1.msra.mxu0 %v426
        %881 = vmatprep.subr.mxu0 0.0
        %882 = vmatpush1.msra.mxu0 %v428
        %883 = vmatprep.subr.mxu0 0.0
        %884 = vmatpush1.msra.mxu0 %v430
        %885 = vmatprep.subr.mxu0 0.0
        %886 = vmatpush1.msra.mxu0 %v432
        %887 = vmatprep.subr.mxu0 0.0
        %888 = vmatpush1.msra.mxu0 %v434
        %889 = vmatprep.subr.mxu0 0.0
        %890 = vmatpush1.msra.mxu0 %v436
        %891 = vmatprep.subr.mxu0 0.0
        %892 = vmatpush1.msra.mxu0 %v438
        %893 = vmatprep.subr.mxu0 0.0
        %894 = vmatpush1.msra.mxu0 %v440
        %895 = vmatprep.subr.mxu0 0.0
        %896 = vmatpush1.msra.mxu0 %v442
        %897 = vmatprep.subr.mxu0 0.0
        %898 = vmatpush1.msra.mxu0 %v444
        %899 = vmatprep.subr.mxu0 0.0
        %900 = vmatpush1.msra.mxu0 %v446
        %901 = vmatprep.subr.mxu0 0.0
        %902 = vmatpush1.msra.mxu0 %v448
        %903 = vmatprep.subr.mxu0 0.0
        %904 = vmatpush1.msra.mxu0 %v450
        %905 = vmatprep.subr.mxu0 0.0
        %906 = vmatpush1.msra.mxu0 %v452
        %907 = vmatprep.subr.mxu0 0.0
        %908 = vmatpush1.msra.mxu0 %v454
        %909 = vmatprep.subr.mxu0 0.0
        %910 = vmatpush1.msra.mxu0 %v456
        %911 = vmatprep.subr.mxu0 0.0
        %912 = vmatpush1.msra.mxu0 %v458
        %913 = vmatprep.subr.mxu0 0.0
        %914 = vmatpush1.msra.mxu0 %v460
        %915 = vmatprep.subr.mxu0 0.0
        %916 = vmatpush1.msra.mxu0 %v462
        %917 = vmatprep.subr.mxu0 0.0
        %918 = vmatpush1.msra.mxu0 %v464
        %919 = vmatprep.subr.mxu0 0.0
        %920 = vmatpush1.msra.mxu0 %v466
        %921 = vmatprep.subr.mxu0 0.0
        %922 = vmatpush1.msra.mxu0 %v468
        %923 = vmatprep.subr.mxu0 0.0
        %924 = vmatpush1.msra.mxu0 %v470
        %925 = vmatprep.subr.mxu0 0.0
        %926 = vmatpush1.msra.mxu0 %v472
        %927 = vmatprep.subr.mxu0 0.0
        %928 = vmatpush1.msra.mxu0 %v474
        %929 = vmatprep.mubr.f32.mxu0 %v779
        %930 = vmatmul.mubr.f32.gmra.mrb[0].mxu0 %v747
        %v931 = vpop.f32.mrb[0].mxu0
        %v932 = vadd.f32 %v862, %v931
        %v933 = vpop.f32.mrb[0].mxu0
        %934 = vdwg.mxu0
        %v935 = vld [vmem:[%s201] sm:$0x1]
        %v936 = vadd.f32 %v935, %v932
        %937 = vst [vmem:[%s201] sm:$0x1] %v936
        %s938 = sand.u32 %s104, 1
        %s939 = scalar_lea.sflag [#allocation4], %s938
        %s940 = sand.u32 %s104, 1
        %s941 = scalar_lea.vmem [#allocation5], %s940
        // Predicated region
        $region37: #{tpu_custom_call.1} parent=27 // pred_check
          %p942 = pneg %p114
        $region38: #{tpu_custom_call.1} parent=27 // pred_check_branch
          %944 = sbr.rel (%p942) target = $region40
        $region39: #{tpu_custom_call.1} parent=27 // pred_region
          %s946 = ssub.s32 16, 16
          %947 = vsyncadd %s939, %s946
          %s948 = sadd.s32 %s25, %s24
          %s949 = smul.addr %s948, 16
          %s950 = scalar_lea.hbm %s2, %s949
          %s952 = sshll.u32 %s941, 4
          %s953 = int_to_ptr.vmem [resolvable:$true] %s952
          %955 = dma.vmem_to_hbm [thread:$0]  %s953, 16, %s950, %s939
        $region40: #{tpu_custom_call.1} parent=27 // pred_fallthru
          _
      $region28: #{tpu_custom_call.1} parent=5 // pred_fallthru
        _
      %p956 = scmp.le.s32.totalorder 2, %s14
      // Predicated region
      $region41: #{tpu_custom_call.1} parent=5 // pred_check
        %p957 = pneg %p956
      $region42: #{tpu_custom_call.1} parent=5 // pred_check_branch
        %959 = sbr.rel (%p957) target = $region44
      $region43: #{tpu_custom_call.1} parent=5 // pred_region
        %s960 = ssub.s32 %s14, 2
        // Predicated region
        $region45: #{tpu_custom_call.1} parent=43 // pred_check
          %p961 = pneg %p120
        $region46: #{tpu_custom_call.1} parent=43 // pred_check_branch
          %963 = sbr.rel (%p961) target = $region48
        $region47: #{tpu_custom_call.1} parent=43 // pred_region
          %s964 = sand.u32 %s105, 1
          %s965 = scalar_lea.sflag [#allocation4], %s964
          %s966 = sand.u32 %s105, 1
          %s967 = scalar_lea.vmem [#allocation5], %s966
          %968 = dma.done %s965, 16
        $region48: #{tpu_custom_call.1} parent=43 // pred_fallthru
          _
      $region44: #{tpu_custom_call.1} parent=5 // pred_fallthru
        _
    $region6: #{tpu_custom_call.1} parent=1 // loop_footer
      %s18 = sadd.s32 1, %s14
    $region7: #{tpu_custom_call.1} parent=1 // loop_footer_branch
      %13 = sbr.rel target = $region3
    $region8: #{tpu_custom_call.1} parent=1 // loop_exit
      _
    %969 = vsyncpa [#allocation3], 1
    %s970 = scalar_lea.sflag [#allocation3], 1
    %971 = vsyncpa %s970, 1
    %972 = vsyncpa [#allocation4], 1
    %s973 = scalar_lea.sflag [#allocation4], 1
    %974 = vsyncpa %s973, 1

</llo_original>
